<compile_context>
chip_gen: v7x
topology: tpu7x:2x2x1
jax: 0.10.0
libtpu: 0.0.40
codegen_flags: <defaults>
</compile_context>

<pallas_src>
import functools

import numpy as np
import jax
import jax.numpy as jnp
from jax import lax
from jax.experimental import pallas as pl
from jax.experimental.pallas import tpu as pltpu


_SENTINEL = -(1 << 30)  # "invalid event" index: never matches any time lane


def _round_up(x, m):
    return ((x + m - 1) // m) * m


def _vmem_estimate(tm, nWin, nSeqPad, KC, EXT, TN, itemsize):
    wtm = nWin * tm
    return (2 * wtm * nSeqPad * itemsize      # TRF slab block, double-buffered
            + 2 * nSeqPad * 128 * 4           # src (.., KC, 1): lane dim pads to 128
            + 2 * tm * TN * 4                 # out block, double-buffered
            + wtm * EXT * 4                   # g scratch
            + KC * EXT * (4 + itemsize)       # one-hot (+ iota) temporaries
            + wtm * KC * itemsize)            # dot LHS slab temporary


def _trf_aligner_kernel(kblk0_ref, knum_ref, src_ref, trf_ref, out_ref, g_ref,
                        *, nWin, PADW):
    # kblk0_ref: SMEM (nBatch*nT,) int32  -- first KC-slab index per (b, it)
    # knum_ref:  SMEM (nBatch*nT,) int32  -- number of KC-slabs per (b, it)
    # src_ref:   VMEM (nKC, KC, 1) int32  -- event times (sentinel = -2^30)
    # trf_ref:   VMEM (nKC, nWin*tm, KC)  -- w-major rows: row = w*tm + c
    # out_ref:   VMEM (tm, TN) f32        -- output tile
    # g_ref:     VMEM (nWin*tm, EXT) f32  -- per-tile matmul scratch
    tm, TN = out_ref.shape
    KC = src_ref.shape[1]
    EXT = g_ref.shape[1]

    b = pl.program_id(1)
    it = pl.program_id(2)
    nT = pl.num_programs(2)
    flat = b * nT + it
    knum = knum_ref[flat]

    @pl.when(knum == 0)
    def _():
        # Event-free tile: zero and skip the MXU entirely.
        out_ref[...] = jnp.zeros_like(out_ref)

    @pl.when(knum > 0)
    def _():
        t0 = it * TN
        kblk0 = kblk0_ref[flat]
        # One lane-iota for the whole tile (hoisted out of the slab loop).
        lane_t = lax.broadcasted_iota(jnp.int32, (KC, EXT), 1)

        def slab_contrib(kblk):
            # One-hot of this slab's events over the extended time window
            # t' in [t0 - PADW, t0 + TN); single MXU matmul per slab.
            shifted = src_ref[kblk] - (t0 - PADW)                  # (KC, 1)
            onehot = (shifted == lane_t).astype(trf_ref.dtype)     # (KC, EXT)
            return jnp.dot(trf_ref[kblk], onehot,
                           preferred_element_type=jnp.float32)     # (nWin*tm, EXT)

        g_ref[...] = slab_contrib(kblk0)

        @pl.when(knum > 1)
        def _():
            def kbody(kc, carry):
                g_ref[...] += slab_contrib(kblk0 + kc)
                return carry
            lax.fori_loop(1, knum, kbody, 0)

        # Fold (overlap-add): out[c, i] = sum_w g[w*tm + c, PADW - w + i].
        # Accumulate each 128-lane chunk in vregs, store once (no RMW of out,
        # lane-dense stores).  Offsets are all static on this path.
        if nWin <= 128:
            for lo in range(0, TN, 128):
                acc = g_ref[pl.ds(0, tm), pl.ds(PADW + lo, 128)]          # w = 0
                for w in range(1, nWin):
                    acc = acc + g_ref[pl.ds(w * tm, tm),
                                      pl.ds(PADW - w + lo, 128)]
                out_ref[:, lo:lo + 128] = acc
        else:
            # TODO(synk): nWin > 128 falls back to dynamic (unaligned) lane
            # slices; a pltpu.roll-based fold would be faster if this matters.
            out_ref[...] = g_ref[pl.ds(0, tm), pl.ds(PADW, TN)]

            def wbody(w, carry):
                row = pl.multiple_of(w * tm, 8)
                out_ref[...] += g_ref[pl.ds(row, tm), pl.ds(PADW - w, TN)]
                return carry
            lax.fori_loop(1, nWin, wbody, 0)


def adjusted_nreallen(sourceIdx, nRealLen):
    """PyTorch's data-dependent length adjustment (maxSrcIdx >= nRealLen).
    This is a host sync and determines a *static* output shape, so call it
    once outside the jitted hot path."""
    maxSrcIdx = int(jax.device_get(jnp.max(sourceIdx[:, -1])))
    return max(int(nRealLen), maxSrcIdx + 1)


def trf_aligner(TRFs, sourceIdx, nRealLen, *, tn=896, tm=None, use_bf16=True,
                vmem_budget_bytes=30 << 20):
    """JAX/Pallas equivalent of TRFAligner.forward.

    TRFs:      (nBatch, outDim, nWin, nSeq) float
    sourceIdx: (nBatch, nSeq) int, sorted ascending per batch (the module
               already assumes this -- it reads sourceIdx[:, -1] as the max).
               All entries must be < nRealLen; call adjusted_nreallen() first
               if that is not guaranteed -- out-of-range events are silently
               dropped here, whereas PyTorch grows the output.
    nRealLen:  static int (output length).
    Returns    (nBatch, outDim, nRealLen) float32.

    tn: time-tile width (multiple of 128; default 896 so EXT = tn + 128 is a
        multiple of 256 for the v6e/v7x MXU).  tm: channel-tile height
        (multiple of 8; auto-derived and VMEM-budgeted by default).
    use_bf16: cast TRF weights to bf16 for the MXU (one-hot is exact, f32
        accumulation); outputs differ from the f32 path at ~1e-3 relative.
    """
    nBatch, outDim, nWin, nSeq = TRFs.shape
    nRealLen = int(nRealLen)
    assert tn % 128 == 0, "tn must be a multiple of 128"

    itemsize = 2 if use_bf16 else 4

    # --- time tiling --------------------------------------------------------
    TN = min(tn, _round_up(nRealLen, 128))
    nRealLenPad = _round_up(nRealLen, TN)
    nT = nRealLenPad // TN
    PADW = 0 if nWin <= 1 else _round_up(nWin - 1, 128)   # left window extension
    EXT = PADW + TN

    # --- event (K) tiling ---------------------------------------------------
    KC = 128 if nSeq <= 128 else 256
    nSeqPad = _round_up(nSeq, KC)
    nKC = nSeqPad // KC

    # --- channel tiling (VMEM-budgeted) --------------------------------------
    out8 = _round_up(outDim, 8)                 # never sublane-sparse tiles
    if tm is None:
        cap = 128 if nWin >= 2 else 256         # keep fold's vreg accumulator small
        tm = min(out8, max(8, ((512 // max(nWin, 1)) // 8) * 8), cap)
        while tm > 8 and _vmem_estimate(tm, nWin, nSeqPad, KC, EXT, TN,
                                        itemsize) > vmem_budget_bytes:
            tm = max(8, ((tm // 2) // 8) * 8)
    assert tm % 8 == 0, "tm must be a multiple of 8"
    nTM = -(-out8 // tm)
    outDimPad = nTM * tm

    est = _vmem_estimate(tm, nWin, nSeqPad, KC, EXT, TN, itemsize)
    # TODO(synk): for very large nSeq the resident TRF slab block can still
    # exceed the budget at tm == 8; that would need HBM-side K chunking.
    vmem_limit = int(min(max(2 * est, 32 << 20), 48 << 20))

    # --- index glue: "last write wins" for duplicate source indices ----------
    src = sourceIdx.astype(jnp.int32)                           # (nBatch, nSeq)
    bidx = jnp.arange(nBatch, dtype=jnp.int32)[:, None]
    pos = jnp.arange(nSeq, dtype=jnp.int32)[None, :]
    last = jnp.full((nBatch, nRealLen), -1, jnp.int32)
    last = last.at[bidx, src].max(jnp.broadcast_to(pos, (nBatch, nSeq)),
                                  mode="drop")
    is_last = last[bidx, src] == pos
    src_masked = jnp.where(is_last, src, jnp.int32(_SENTINEL))

    # --- per-(batch, time-tile) K-slab ranges (uses sorted original src) -----
    t0s = jnp.arange(nT, dtype=jnp.int32) * TN
    lo_t = t0s - (nWin - 1)                                     # (nT,)
    hi_t = t0s + TN
    start = jnp.sum(src[:, :, None] < lo_t[None, None, :], axis=1,
                    dtype=jnp.int32)                            # (nBatch, nT)
    end = jnp.sum(src[:, :, None] < hi_t[None, None, :], axis=1,
                  dtype=jnp.int32)
    kblk0 = jnp.minimum(start // KC, nKC - 1).astype(jnp.int32)
    knum = jnp.where(end > start,
                     (end - kblk0 * KC + KC - 1) // KC, 0).astype(jnp.int32)
    kblk0_flat = kblk0.reshape(-1)                              # (nBatch*nT,)
    knum_flat = knum.reshape(-1)

    src_col = jnp.pad(src_masked, ((0, 0), (0, nSeqPad - nSeq)),
                      constant_values=_SENTINEL)
    src_col = src_col.reshape(nBatch, nKC, KC, 1)

    # --- layout plumbing: (nKC, nWin*tm, KC) event-slab TRF operand ----------
    trf = TRFs.astype(jnp.bfloat16 if use_bf16 else jnp.float32)
    trf = jnp.pad(trf, ((0, 0), (0, outDimPad - outDim), (0, 0),
                        (0, nSeqPad - nSeq)))
    trf = trf.reshape(nBatch, nTM, tm, nWin, nKC, KC)
    trf = trf.transpose(0, 1, 4, 3, 2, 5).reshape(nBatch, nTM, nKC,
                                                  nWin * tm, KC)

    grid_spec = pltpu.PrefetchScalarGridSpec(
        num_scalar_prefetch=2,
        grid=(nTM, nBatch, nT),
        in_specs=[
            pl.BlockSpec((pl.Squeezed(), nKC, KC, 1),
                         lambda m, b, it, kb, kn: (b, 0, 0, 0)),
            pl.BlockSpec((pl.Squeezed(), pl.Squeezed(), nKC, nWin * tm, KC),
                         lambda m, b, it, kb, kn: (b, m, 0, 0, 0)),
        ],
        out_specs=pl.BlockSpec((pl.Squeezed(), tm, TN),
                               lambda m, b, it, kb, kn: (b, m, it)),
        scratch_shapes=[pltpu.VMEM((nWin * tm, EXT), jnp.float32)],
    )

    flops = 2 * (nWin * tm) * KC * EXT * (nBatch * nTM * nT)
    bytes_accessed = (nBatch * nTM * nKC * nWin * tm * KC * itemsize
                      + nBatch * nSeqPad * 4
                      + nBatch * outDimPad * nRealLenPad * 4)
    cost = pl.CostEstimate(flops=flops, transcendentals=0,
                           bytes_accessed=bytes_accessed)

    out = pl.pallas_call(
        functools.partial(_trf_aligner_kernel, nWin=nWin, PADW=PADW),
        out_shape=jax.ShapeDtypeStruct((nBatch, outDimPad, nRealLenPad),
                                       jnp.float32),
        grid_spec=grid_spec,
        compiler_params=pltpu.CompilerParams(
            # Time innermost keeps the TRF slab resident across time tiles;
            # all-parallel lets the v7x megacore split pick any axis >= 2.
            # (Flip the last axis to "arbitrary" if profiling ever shows the
            # TRF block being re-fetched per time tile.)
            dimension_semantics=("parallel", "parallel", "parallel"),
            vmem_limit_bytes=vmem_limit),
        cost_estimate=cost,
    )(kblk0_flat, knum_flat, src_col, trf)

    return out[:, :outDim, :nRealLen]


def _reference_numpy(TRFs, sourceIdx, nRealLen):
    """Pure-numpy re-implementation of the PyTorch forward (scatter + fold)."""
    nBatch, outDim, nWin, nSeq = TRFs.shape
    maxSrcIdx = int(sourceIdx[:, -1].max())
    if maxSrcIdx >= nRealLen:
        nRealLen = maxSrcIdx + 1
    cache = np.zeros((nBatch, outDim, nWin, nRealLen), np.float32)
    for b in range(nBatch):
        for s in range(nSeq):            # later s overwrites earlier (last wins)
            cache[b, :, :, sourceIdx[b, s]] = TRFs[b, :, :, s]
    out = np.zeros((nBatch, outDim, nRealLen + nWin - 1), np.float32)
    for w in range(nWin):                # fold with kernel (nWin, 1) = overlap-add
        out[:, :, w:w + nRealLen] += cache[:, :, w, :]
    return out[:, :, :nRealLen]


if __name__ == "__main__":
    nBatch, outDim, nWin, nSeq, nRealLen = 2, 4, 8, 8, 16

    key = jax.random.PRNGKey(0)
    k_trf, k_idx = jax.random.split(key)

    TRFs = jax.random.normal(k_trf, (nBatch, outDim, nWin, nSeq),
                             dtype=jnp.float32)
    # sorted event times with possible duplicates (exercises last-write-wins)
    sourceIdx = jnp.sort(
        jax.random.randint(k_idx, (nBatch, nSeq), 0, nRealLen), axis=1
    ).astype(jnp.int32)

    # data-dependent output length: resolved host-side, outside the hot path
    nRealLen = adjusted_nreallen(sourceIdx, nRealLen)

    # 1) exact path (f32 TRF weights): bit-comparable with the f32 reference
    aligner_f32 = jax.jit(functools.partial(trf_aligner, use_bf16=False),
                          static_argnums=2)
    out_f32 = jax.block_until_ready(aligner_f32(TRFs, sourceIdx, nRealLen))
    ref_f32 = _reference_numpy(np.asarray(TRFs), np.asarray(sourceIdx), nRealLen)
    assert out_f32.shape == ref_f32.shape, (out_f32.shape, ref_f32.shape)
    np.testing.assert_allclose(np.asarray(out_f32), ref_f32,
                               rtol=1e-5, atol=1e-5)

    # 2) default path (bf16 TRF weights, f32 accumulate): compare against a
    #    reference built from bf16-rounded weights (only the cast differs)
    aligner = jax.jit(trf_aligner, static_argnums=2)
    out_bf16 = jax.block_until_ready(aligner(TRFs, sourceIdx, nRealLen))
    trf_bf16 = np.asarray(TRFs.astype(jnp.bfloat16).astype(jnp.float32))
    ref_bf16 = _reference_numpy(trf_bf16, np.asarray(sourceIdx), nRealLen)
    np.testing.assert_allclose(np.asarray(out_bf16), ref_bf16,
                               rtol=1e-5, atol=1e-5)

    print("KERNEL_OK")
</pallas_src>

<mosaic_0001>
module attributes {stable_mosaic.version = 11 : i64} {
  func.func private @main(%arg0: i32) attributes {dimension_semantics = [#tpu.dimension_semantics<core_parallel>], iteration_bounds = array<i64: 2>, tpu.core_type = #tpu.core_type<sc_scalar_subcore>, window_params = []} {
    return
  }
}

module attributes {stable_mosaic.version = 11 : i64} {
  func.func private @main(%arg0: i32) attributes {dimension_semantics = [#tpu.dimension_semantics<core_parallel>], iteration_bounds = array<i64: 2>, tpu.core_type = #tpu.core_type<sc_scalar_subcore>, window_params = []} {
    return
  }
}

module attributes {stable_mosaic.version = 11 : i64} {
  func.func @_trf_aligner_kernel(%arg0: i32, %arg1: i32, %arg2: i32, %arg3: memref<2xi32, #tpu.memory_space<smem>>, %arg4: memref<2xi32, #tpu.memory_space<smem>>, %arg5: memref<1x1x128x1xi32, #tpu.memory_space<vmem>>, %arg6: memref<1x1x1x64x128xf32, #tpu.memory_space<vmem>>, %arg7: memref<1x8x128xf32, #tpu.memory_space<vmem>>, %arg8: memref<64x256xf32, #tpu.memory_space<vmem>>) attributes {dimension_semantics = [#tpu.dimension_semantics<parallel>, #tpu.dimension_semantics<parallel>, #tpu.dimension_semantics<parallel>], iteration_bounds = array<i64: 1, 2, 1>, scalar_prefetch = 2 : i64, scratch_operands = 1 : i64, tpu.core_type = #tpu.core_type<tc>, window_params = [{transform_indices = @transform_0, window_bounds = array<i64: 1, 1, 128, 1>}, {transform_indices = @transform_1, window_bounds = array<i64: 1, 1, 1, 64, 128>}, {transform_indices = @transform_2, window_bounds = array<i64: 1, 8, 128>}]} {
    %c1_i32 = arith.constant 1 : i32
    %0 = arith.muli %arg1, %c1_i32 : i32
    %1 = arith.addi %0, %arg2 : i32
    %2 = arith.index_cast %1 : i32 to index
    %3 = memref.load %arg4[%2] : memref<2xi32, #tpu.memory_space<smem>>
    %c0_i32 = arith.constant 0 : i32
    %4 = arith.cmpi eq, %3, %c0_i32 : i32
    %5 = arith.extui %4 : i1 to i32
    %c0_i32_0 = arith.constant 0 : i32
    %6 = arith.cmpi ne, %5, %c0_i32_0 : i32
    scf.if %6 {
      %cst = arith.constant 0.000000e+00 : f32
      %10 = vector.broadcast %cst : f32 to vector<8x128xf32>
      %c0 = arith.constant 0 : index
      %c0_3 = arith.constant 0 : index
      %c0_4 = arith.constant 0 : index
      %11 = vector.load %arg7[%c0, %c0_3, %c0_4] : memref<1x8x128xf32, #tpu.memory_space<vmem>>, vector<1x8x128xf32>
      %12 = vector.shape_cast %11 : vector<1x8x128xf32> to vector<8x128xf32>
      %13 = vector.shape_cast %10 : vector<8x128xf32> to vector<1x8x128xf32>
      tpu.vector_store %arg7[%c0, %c0_3, %c0_4], %13 {strides = array<i32>} : memref<1x8x128xf32, #tpu.memory_space<vmem>>, vector<1x8x128xf32>,
    } else {
    }
    %c0_i32_1 = arith.constant 0 : i32
    %7 = arith.cmpi sgt, %3, %c0_i32_1 : i32
    %8 = arith.extui %7 : i1 to i32
    %c0_i32_2 = arith.constant 0 : i32
    %9 = arith.cmpi ne, %8, %c0_i32_2 : i32
    scf.if %9 {
      %c128_i32 = arith.constant 128 : i32
      %10 = arith.muli %arg2, %c128_i32 : i32
      %11 = arith.index_cast %1 : i32 to index
      %12 = memref.load %arg3[%11] : memref<2xi32, #tpu.memory_space<smem>>
      %13 = tpu.iota {dimensions = array<i32: 1>} : vector<128x256xi32>
      %c0 = arith.constant 0 : index
      %14 = arith.index_cast %12 : i32 to index
      %c0_3 = arith.constant 0 : index
      %c0_4 = arith.constant 0 : index
      %15 = vector.load %arg5[%c0, %14, %c0_3, %c0_4] : memref<1x1x128x1xi32, #tpu.memory_space<vmem>>, vector<1x1x128x1xi32>
      %16 = vector.shape_cast %15 : vector<1x1x128x1xi32> to vector<128x1xi32>
      %c128_i32_5 = arith.constant 128 : i32
      %17 = arith.subi %10, %c128_i32_5 : i32
      %18 = vector.broadcast %17 : i32 to vector<128x1xi32>
      %19 = arith.subi %16, %18 : vector<128x1xi32>
      %20 = vector.broadcast %19 : vector<128x1xi32> to vector<128x256xi32>
      %21 = arith.cmpi eq, %20, %13 : vector<128x256xi32>
      %22 = arith.extui %21 : vector<128x256xi1> to vector<128x256xi32>
      %23 = arith.sitofp %22 : vector<128x256xi32> to vector<128x256xf32>
      %c0_6 = arith.constant 0 : index
      %c0_7 = arith.constant 0 : index
      %24 = arith.index_cast %12 : i32 to index
      %c0_8 = arith.constant 0 : index
      %c0_9 = arith.constant 0 : index
      %25 = vector.load %arg6[%c0_6, %c0_7, %24, %c0_8, %c0_9] : memref<1x1x1x64x128xf32, #tpu.memory_space<vmem>>, vector<1x1x1x64x128xf32>
      %26 = vector.shape_cast %25 : vector<1x1x1x64x128xf32> to vector<64x128xf32>
      %cst = arith.constant dense<0.000000e+00> : vector<64x256xf32>
      %27 = tpu.matmul %26, %23, %cst {dimension_numbers = #tpu.dot_dimension_numbers<[1], [0], [0], [1], [0, 0, 1, 1], [], []>} : vector<64x128xf32>, vector<128x256xf32>, vector<64x256xf32> -> vector<64x256xf32>
      %c0_10 = arith.constant 0 : index
      %c0_11 = arith.constant 0 : index
      %28 = vector.load %arg8[%c0_10, %c0_11] : memref<64x256xf32, #tpu.memory_space<vmem>>, vector<64x256xf32>
      tpu.vector_store %arg8[%c0_10, %c0_11], %27 {strides = array<i32>} : memref<64x256xf32, #tpu.memory_space<vmem>>, vector<64x256xf32>,
      %c1_i32_12 = arith.constant 1 : i32
      %29 = arith.cmpi sgt, %3, %c1_i32_12 : i32
      %30 = arith.extui %29 : i1 to i32
      %c0_i32_13 = arith.constant 0 : i32
      %31 = arith.cmpi ne, %30, %c0_i32_13 : i32
      scf.if %31 {
        %c0_i32_18 = arith.constant 0 : i32
        %c1_i32_19 = arith.constant 1 : i32
        %50 = arith.subi %3, %c1_i32_19 : i32
        %51 = arith.addi %c1_i32_19, %50 : i32
        %c1_i32_20 = arith.constant 1 : i32
        scf.for %arg9 = %c1_i32_19 to %51 step %c1_i32_20  : i32 {
          %c0_21 = arith.constant 0 : index
          %c0_22 = arith.constant 0 : index
          %52 = vector.load %arg8[%c0_21, %c0_22] : memref<64x256xf32, #tpu.memory_space<vmem>>, vector<64x256xf32>
          %53 = arith.addi %12, %arg9 : i32
          %c0_23 = arith.constant 0 : index
          %54 = arith.index_cast %53 : i32 to index
          %c0_24 = arith.constant 0 : index
          %c0_25 = arith.constant 0 : index
          %55 = vector.load %arg5[%c0_23, %54, %c0_24, %c0_25] : memref<1x1x128x1xi32, #tpu.memory_space<vmem>>, vector<1x1x128x1xi32>
          %56 = vector.shape_cast %55 : vector<1x1x128x1xi32> to vector<128x1xi32>
          %c128_i32_26 = arith.constant 128 : i32
          %57 = arith.subi %10, %c128_i32_26 : i32
          %58 = vector.broadcast %57 : i32 to vector<128x1xi32>
          %59 = arith.subi %56, %58 : vector<128x1xi32>
          %60 = vector.broadcast %59 : vector<128x1xi32> to vector<128x256xi32>
          %61 = arith.cmpi eq, %60, %13 : vector<128x256xi32>
          %62 = arith.extui %61 : vector<128x256xi1> to vector<128x256xi32>
          %63 = arith.sitofp %62 : vector<128x256xi32> to vector<128x256xf32>
          %c0_27 = arith.constant 0 : index
          %c0_28 = arith.constant 0 : index
          %64 = arith.index_cast %53 : i32 to index
          %c0_29 = arith.constant 0 : index
          %c0_30 = arith.constant 0 : index
          %65 = vector.load %arg6[%c0_27, %c0_28, %64, %c0_29, %c0_30] : memref<1x1x1x64x128xf32, #tpu.memory_space<vmem>>, vector<1x1x1x64x128xf32>
          %66 = vector.shape_cast %65 : vector<1x1x1x64x128xf32> to vector<64x128xf32>
          %cst_31 = arith.constant dense<0.000000e+00> : vector<64x256xf32>
          %67 = tpu.matmul %66, %63, %cst_31 {dimension_numbers = #tpu.dot_dimension_numbers<[1], [0], [0], [1], [0, 0, 1, 1], [], []>} : vector<64x128xf32>, vector<128x256xf32>, vector<64x256xf32> -> vector<64x256xf32>
          %68 = arith.addf %52, %67 : vector<64x256xf32>
          %c0_32 = arith.constant 0 : index
          %c0_33 = arith.constant 0 : index
          %69 = vector.load %arg8[%c0_32, %c0_33] : memref<64x256xf32, #tpu.memory_space<vmem>>, vector<64x256xf32>
          tpu.vector_store %arg8[%c0_32, %c0_33], %68 {strides = array<i32>} : memref<64x256xf32, #tpu.memory_space<vmem>>, vector<64x256xf32>,
        }
      } else {
      }
      %c0_14 = arith.constant 0 : index
      %c128 = arith.constant 128 : index
      %32 = vector.load %arg8[%c0_14, %c128] : memref<64x256xf32, #tpu.memory_space<vmem>>, vector<8x128xf32>
      %c8 = arith.constant 8 : index
      %c127 = arith.constant 127 : index
      %33 = vector.load %arg8[%c8, %c127] : memref<64x256xf32, #tpu.memory_space<vmem>>, vector<8x128xf32>
      %34 = arith.addf %32, %33 : vector<8x128xf32>
      %c16 = arith.constant 16 : index
      %c126 = arith.constant 126 : index
      %35 = vector.load %arg8[%c16, %c126] : memref<64x256xf32, #tpu.memory_space<vmem>>, vector<8x128xf32>
      %36 = arith.addf %34, %35 : vector<8x128xf32>
      %c24 = arith.constant 24 : index
      %c125 = arith.constant 125 : index
      %37 = vector.load %arg8[%c24, %c125] : memref<64x256xf32, #tpu.memory_space<vmem>>, vector<8x128xf32>
      %38 = arith.addf %36, %37 : vector<8x128xf32>
      %c32 = arith.constant 32 : index
      %c124 = arith.constant 124 : index
      %39 = vector.load %arg8[%c32, %c124] : memref<64x256xf32, #tpu.memory_space<vmem>>, vector<8x128xf32>
      %40 = arith.addf %38, %39 : vector<8x128xf32>
      %c40 = arith.constant 40 : index
      %c123 = arith.constant 123 : index
      %41 = vector.load %arg8[%c40, %c123] : memref<64x256xf32, #tpu.memory_space<vmem>>, vector<8x128xf32>
      %42 = arith.addf %40, %41 : vector<8x128xf32>
      %c48 = arith.constant 48 : index
      %c122 = arith.constant 122 : index
      %43 = vector.load %arg8[%c48, %c122] : memref<64x256xf32, #tpu.memory_space<vmem>>, vector<8x128xf32>
      %44 = arith.addf %42, %43 : vector<8x128xf32>
      %c56 = arith.constant 56 : index
      %c121 = arith.constant 121 : index
      %45 = vector.load %arg8[%c56, %c121] : memref<64x256xf32, #tpu.memory_space<vmem>>, vector<8x128xf32>
      %46 = arith.addf %44, %45 : vector<8x128xf32>
      %c0_15 = arith.constant 0 : index
      %c0_16 = arith.constant 0 : index
      %c0_17 = arith.constant 0 : index
      %47 = vector.load %arg7[%c0_15, %c0_16, %c0_17] : memref<1x8x128xf32, #tpu.memory_space<vmem>>, vector<1x8x128xf32>
      %48 = vector.shape_cast %47 : vector<1x8x128xf32> to vector<8x128xf32>
      %49 = vector.shape_cast %46 : vector<8x128xf32> to vector<1x8x128xf32>
      tpu.vector_store %arg7[%c0_15, %c0_16, %c0_17], %49 {strides = array<i32>} : memref<1x8x128xf32, #tpu.memory_space<vmem>>, vector<1x8x128xf32>,
    } else {
    }
    return
  }
  func.func @transform_0(%arg0: i32, %arg1: i32, %arg2: i32, %arg3: memref<2xi32, #tpu.memory_space<smem>>, %arg4: memref<2xi32, #tpu.memory_space<smem>>) -> (i32, i32, i32, i32) {
    %c0_i32 = arith.constant 0 : i32
    %c0_i32_0 = arith.constant 0 : i32
    %c0_i32_1 = arith.constant 0 : i32
    %c0_i32_2 = arith.constant 0 : i32
    return %arg1, %c0_i32, %c0_i32_0, %c0_i32_1 : i32, i32, i32, i32
  }
  func.func @transform_1(%arg0: i32, %arg1: i32, %arg2: i32, %arg3: memref<2xi32, #tpu.memory_space<smem>>, %arg4: memref<2xi32, #tpu.memory_space<smem>>) -> (i32, i32, i32, i32, i32) {
    %c0_i32 = arith.constant 0 : i32
    %c0_i32_0 = arith.constant 0 : i32
    %c0_i32_1 = arith.constant 0 : i32
    %c0_i32_2 = arith.constant 0 : i32
    return %arg1, %arg0, %c0_i32, %c0_i32_0, %c0_i32_1 : i32, i32, i32, i32, i32
  }
  func.func @transform_2(%arg0: i32, %arg1: i32, %arg2: i32, %arg3: memref<2xi32, #tpu.memory_space<smem>>, %arg4: memref<2xi32, #tpu.memory_space<smem>>) -> (i32, i32, i32) {
    %c0_i32 = arith.constant 0 : i32
    return %arg1, %arg0, %arg2 : i32, i32, i32
  }
}

</mosaic_0001>

<llo_original>
// kernel: trf_aligner.1
$region0: #{trf_aligner.1}
  #allocation0 [shape = 'u32[]', space=smem, size = 0x4, offset = 0x4, fixed_abs, tag = 'smem constant byte address 0x4 - core index']
  #allocation1 [shape = 'u32[144,128]{1,0:T(1,128)}', space=vmem, size = 0x12000, scoped, tag = 'internal scratch']
  #allocation2 [shape = 'f32[64,256]{1,0:T(8,128)}', space=vmem, size = 0x10000, scoped, tag = 'scratch operand']
  #allocation3 [shape = 's32[1]{0}', space=sflag, size = 0x4, scoped, tag = 'scoped memory for trf_aligner.1']
  #allocation4 [shape = 'u8[512]{0}', space=smem, size = 0x200, scoped, tag = 'prefetched SMEM operand 0']
  #allocation5 [shape = 'u8[512]{0}', space=smem, size = 0x200, scoped, tag = 'prefetched SMEM operand 1']
  %s0 = inlined_call_operand.vmem [shape: s32[2], index: 0, kind: input, shape index: {}]
  %s1 = inlined_call_operand.vmem [shape: s32[2], index: 1, kind: input, shape index: {}]
  %s2 = inlined_call_operand.vmem [shape: s32[2,1,128,1], index: 2, kind: input, shape index: {}]
  %s3 = inlined_call_operand.vmem [shape: f32[2,1,1,64,128], index: 3, kind: input, shape index: {}]
  %s4 = inlined_call_operand.vmem [shape: f32[2,8,128], index: 4, kind: output, shape index: {}]
  %s5 = sld [smem:[#allocation0]]
  $region60: #{trf_aligner.1} parent=0
    _
  %s7 = ssub.s32 1, %s5
  %s8 = scalar_select 0, %s7, %s5
  %s9 = sshll.u32 %s0, 4
  %s10 = int_to_ptr.vmem [resolvable:$true] %s9
  %12 = dma.vmem_to_smem %s10, 16, [#allocation4], [#allocation3]
  %s13 = sshll.u32 %s1, 4
  %s14 = int_to_ptr.vmem [resolvable:$true] %s13
  %16 = dma.vmem_to_smem %s14, 16, [#allocation5], [#allocation3]
  %17 = dma.done [#allocation3], 32
  %18 = sfence
  loop: start=0, step=1, limit=4
  $region2: #{trf_aligner.1} parent=0 // loop_pre_header
    _
  $region3: #{trf_aligner.1} parent=0 // loop_header
    %s20 = sphi 0, %s24
    %p21 = scmp.ge.s32.totalorder %s20, 4
    %s27 = sphi 0, %s46
    %s28 = sphi 0, %s42
    %s29 = sphi 0, %s38
    %s30 = sphi 0, %s27
    %s31 = sphi 0, %s28
    %s32 = sphi 0, %s29
    %s33 = sphi 0, %s30
    %s34 = sphi 0, %s31
    %s35 = sphi 0, %s32
    %s49 = sphi 0, %s51
    %s52 = sphi 0, %s49
    %s53 = sphi 0, %s52
    %s69 = sphi 0, %s53
    %s77 = sphi 0, %s79
    %s80 = sphi 0, %s77
    %s81 = sphi 0, %s80
    %s97 = sphi 0, %s81
    %s107 = sphi 0, %s109
    %s110 = sphi 0, %s107
    %s111 = sphi 0, %s110
    %s127 = sphi 0, %s111
  $region4: #{trf_aligner.1} parent=0 // loop_header_branch
    %23 = sbr.rel (%p21) target = $region8
  $region5: #{trf_aligner.1} parent=0 // loop_body
    %s25 = ssub.s32 %s20, 1
    %s26 = ssub.s32 %s20, 2
    %s36 = sadd.s32 1, %s29
    %p37 = scmp.ge.s32.totalorder %s36, 1
    %s38 = scalar_select %p37, 0, %s36
    %s39 = sadd.s32 1, %s28
    %s40 = scalar_select %p37, %s39, %s28
    %p41 = scmp.ge.s32.totalorder %s40, 2
    %s42 = scalar_select %p41, 0, %s40
    %s43 = sadd.s32 1, %s27
    %s44 = scalar_select %p41, %s43, %s27
    %p45 = scmp.ge.s32.totalorder %s44, 1
    %s46 = scalar_select %p45, 0, %s44
    %s47 = ssub.s32 %s28, %s42
    %p48 = scmp.eq.s32.totalorder %s47, 0
    %s50 = sadd.s32 %s49, 1
    %s51 = scalar_select %p48, %s49, %s50
    %p54 = pneg %p48
    %p55 = scmp.eq.s32.totalorder %s20, 1
    %p56 = por %p54, %p55
    %p57 = scmp.ne.s32.totalorder %s49, %s52
    %p58 = scmp.eq.s32.totalorder %s20, 0
    %p59 = por %p57, %p58
    %p60 = scmp.ne.s32.totalorder %s49, %s52
    %p61 = scmp.eq.s32.totalorder %s25, 1
    %p62 = por %p60, %p61
    %p63 = scmp.ne.s32.totalorder %s52, %s53
    %p64 = scmp.eq.s32.totalorder %s25, 0
    %p65 = por %p63, %p64
    %p66 = scmp.ne.s32.totalorder %s52, %s53
    %p67 = scmp.eq.s32.totalorder %s26, 1
    %p68 = por %p66, %p67
    %p70 = scmp.ne.s32.totalorder %s53, %s69
    %p71 = scmp.eq.s32.totalorder %s26, 0
    %p72 = por %p70, %p71
    %s73 = ssub.s32 %s28, %s42
    %s74 = ssub.s32 %s27, %s46
    %s75 = sor.u32 %s73, %s74
    %p76 = scmp.eq.s32.totalorder %s75, 0
    %s78 = sadd.s32 %s77, 1
    %s79 = scalar_select %p76, %s77, %s78
    %p82 = pneg %p76
    %p83 = scmp.eq.s32.totalorder %s20, 1
    %p84 = por %p82, %p83
    %p85 = scmp.ne.s32.totalorder %s77, %s80
    %p86 = scmp.eq.s32.totalorder %s20, 0
    %p87 = por %p85, %p86
    %p88 = scmp.ne.s32.totalorder %s77, %s80
    %p89 = scmp.eq.s32.totalorder %s25, 1
    %p90 = por %p88, %p89
    %p91 = scmp.ne.s32.totalorder %s80, %s81
    %p92 = scmp.eq.s32.totalorder %s25, 0
    %p93 = por %p91, %p92
    %p94 = scmp.ne.s32.totalorder %s80, %s81
    %p95 = scmp.eq.s32.totalorder %s26, 1
    %p96 = por %p94, %p95
    %p98 = scmp.ne.s32.totalorder %s81, %s97
    %p99 = scmp.eq.s32.totalorder %s26, 0
    %p100 = por %p98, %p99
    %s101 = ssub.s32 %s28, %s42
    %s102 = ssub.s32 %s27, %s46
    %s103 = sor.u32 %s101, %s102
    %s104 = ssub.s32 %s29, %s38
    %s105 = sor.u32 %s103, %s104
    %p106 = scmp.eq.s32.totalorder %s105, 0
    %s108 = sadd.s32 %s107, 1
    %s109 = scalar_select %p106, %s107, %s108
    %p112 = pneg %p106
    %p113 = scmp.eq.s32.totalorder %s20, 1
    %p114 = por %p112, %p113
    %p115 = scmp.ne.s32.totalorder %s107, %s110
    %p116 = scmp.eq.s32.totalorder %s20, 0
    %p117 = por %p115, %p116
    %p118 = scmp.ne.s32.totalorder %s107, %s110
    %p119 = scmp.eq.s32.totalorder %s25, 1
    %p120 = por %p118, %p119
    %p121 = scmp.ne.s32.totalorder %s110, %s111
    %p122 = scmp.eq.s32.totalorder %s25, 0
    %p123 = por %p121, %p122
    %p124 = scmp.ne.s32.totalorder %s110, %s111
    %p125 = scmp.eq.s32.totalorder %s26, 1
    %p126 = por %p124, %p125
    %p128 = scmp.ne.s32.totalorder %s111, %s127
    %p129 = scmp.eq.s32.totalorder %s26, 0
    %p130 = por %p128, %p129
    %p131 = scmp.le.s32.totalorder 1, %s20
    %p132 = scmp.lt.s32.totalorder %s20, 3
    %p133 = pnand %p131, %p132
    %p134 = pneg %p133
    // Predicated region
    $region9: #{trf_aligner.1} parent=5 // pred_check
      _
    $region10: #{trf_aligner.1} parent=5 // pred_check_branch
      %136 = sbr.rel (%p133) target = $region12
    $region11: #{trf_aligner.1} parent=5 // pred_region
      %s137 = ssub.s32 %s20, 1
    $region12: #{trf_aligner.1} parent=5 // pred_fallthru
      _
    %p138 = scmp.lt.s32.totalorder %s20, 2
    // Predicated region
    $region13: #{trf_aligner.1} parent=5 // pred_check
      %p139 = pneg %p138
    $region14: #{trf_aligner.1} parent=5 // pred_check_branch
      %141 = sbr.rel (%p139) target = $region16
    $region15: #{trf_aligner.1} parent=5 // pred_region
      // Predicated region
      $region17: #{trf_aligner.1} parent=15 // pred_check
        %p142 = pneg %p59
      $region18: #{trf_aligner.1} parent=15 // pred_check_branch
        %144 = sbr.rel (%p142) target = $region20
      $region19: #{trf_aligner.1} parent=15 // pred_region
        %p145 = scmp.lt.s32.totalorder %s28, 1
        %s146 = scalar_select %p145, %s28, 1
        %s147 = smul.addr %s146, 16
        %s148 = smul.addr %s147, 8
        %s149 = scalar_lea.vmem %s2, %s148
      $region20: #{trf_aligner.1} parent=15 // pred_fallthru
        _
      // Predicated region
      $region21: #{trf_aligner.1} parent=15 // pred_check
        %p150 = pneg %p87
      $region22: #{trf_aligner.1} parent=15 // pred_check_branch
        %152 = sbr.rel (%p150) target = $region24
      $region23: #{trf_aligner.1} parent=15 // pred_region
        %p153 = scmp.lt.s32.totalorder %s28, 1
        %s154 = scalar_select %p153, %s28, 1
        %p155 = scmp.lt.s32.totalorder %s27, 0
        %s156 = scalar_select %p155, %s27, 0
        %s157 = smul.addr %s156, 8
        %s158 = smul.addr %s154, 8
        %s159 = sadd.s32 %s157, %s158
        %s160 = smul.addr %s159, 8
        %s161 = scalar_lea.vmem %s3, %s160
      $region24: #{trf_aligner.1} parent=15 // pred_fallthru
        _
    $region16: #{trf_aligner.1} parent=5 // pred_fallthru
      _
    %p162 = scmp.le.s32.totalorder 1, %s20
    %p163 = scmp.lt.s32.totalorder %s20, 3
    %p164 = pnand %p162, %p163
    %p165 = pneg %p164
    // Predicated region
    $region25: #{trf_aligner.1} parent=5 // pred_check
      _
    $region26: #{trf_aligner.1} parent=5 // pred_check_branch
      %167 = sbr.rel (%p164) target = $region28
    $region27: #{trf_aligner.1} parent=5 // pred_region
      %s168 = ssub.s32 %s20, 1
      %p169 = scmp.lt.s32.totalorder %s31, 1
      %s170 = scalar_select %p169, %s31, 1
      %s171 = smul.addr %s170, 16
      %s172 = smul.addr %s171, 8
      %s173 = scalar_lea.vmem %s2, %s172
      %p174 = pneg %p65
      %p175 = pneg %p62
      %p176 = scmp.lt.s32.totalorder %s31, 1
      %s177 = scalar_select %p176, %s31, 1
      %p178 = scmp.lt.s32.totalorder %s30, 0
      %s179 = scalar_select %p178, %s30, 0
      %s180 = smul.addr %s179, 8
      %s181 = smul.addr %s177, 8
      %s182 = sadd.s32 %s180, %s181
      %s183 = smul.addr %s182, 8
      %s184 = scalar_lea.vmem %s3, %s183
      %p185 = pneg %p93
      %p186 = pneg %p90
      %p187 = pneg %p123
      %p188 = pneg %p120
      %p189 = scmp.lt.s32.totalorder %s31, 1
      %s190 = scalar_select %p189, %s31, 1
      %p191 = scmp.lt.s32.totalorder %s30, 0
      %s192 = scalar_select %p191, %s30, 0
      %p193 = scmp.lt.s32.totalorder %s32, 0
      %s194 = scalar_select %p193, %s32, 0
      %s195 = sadd.s32 %s194, %s192
      %s196 = sadd.s32 %s195, %s190
      %s197 = smul.addr %s196, 8
      %s198 = scalar_lea.vmem %s4, %s197
      %p199 = scmp.lt.s32.totalorder %s31, 1
      %s200 = scalar_select %p199, %s31, 1
      %s201 = smul.addr %s200, 16
      %s202 = smul.addr %s201, 8
      %s203 = scalar_lea.vmem %s2, %s202
      %p204 = scmp.lt.s32.totalorder %s31, 1
      %s205 = scalar_select %p204, %s31, 1
      %p206 = scmp.lt.s32.totalorder %s30, 0
      %s207 = scalar_select %p206, %s30, 0
      %s208 = smul.addr %s207, 8
      %s209 = smul.addr %s205, 8
      %s210 = sadd.s32 %s208, %s209
      %s211 = smul.addr %s210, 8
      %s212 = scalar_lea.vmem %s3, %s211
      %p213 = scmp.lt.s32.totalorder %s31, 1
      %s214 = scalar_select %p213, %s31, 1
      %p215 = scmp.lt.s32.totalorder %s30, 0
      %s216 = scalar_select %p215, %s30, 0
      %p217 = scmp.lt.s32.totalorder %s32, 0
      %s218 = scalar_select %p217, %s32, 0
      %s219 = sadd.s32 %s218, %s216
      %s220 = sadd.s32 %s219, %s214
      %s221 = smul.addr %s220, 8
      %s222 = scalar_lea.vmem %s4, %s221
      %s223 = sadd.s32 %s31, %s32
      %s224 = sld [smem:[#allocation5 + %s223]]
      %p225 = scmp.eq.s32.totalorder %s224, 0
      // Predicated region
      $region29: #{trf_aligner.1} parent=27 // pred_check
        %p226 = pneg %p225
      $region30: #{trf_aligner.1} parent=27 // pred_check_branch
        %228 = sbr.rel (%p226) target = $region32
      $region31: #{trf_aligner.1} parent=27 // pred_region
        %229 = vst [vmem:[%s222] sm:$0xff] 0.0
      $region32: #{trf_aligner.1} parent=27 // pred_fallthru
        _
      %p230 = scmp.gt.s32.totalorder %s224, 0
      // Predicated region
      $region33: #{trf_aligner.1} parent=27 // pred_check
        %p231 = pneg %p230
      $region34: #{trf_aligner.1} parent=27 // pred_check_branch
        %233 = sbr.rel (%p231) target = $region36
      $region35: #{trf_aligner.1} parent=27 // pred_region
        %s234 = smul.u32 %s32, 128
        %s235 = sld [smem:[#allocation4 + %s223]]
        %v236 = vlaneseq
        %v237 = vand.u32 %v236, 127
        %v238 = vadd.s32 %v237, 128
        %s239 = smul.u32 %s235, 128
        %s240 = scalar_lea.vmem %s203, %s239
        %v241 = vld [vmem:[%s240] sm:$0xff]
        %v242 = vld [vmem:[%s240 + $0x8] sm:$0xff]
        %v243 = vld [vmem:[%s240 + $0x10] sm:$0xff]
        %v244 = vld [vmem:[%s240 + $0x18] sm:$0xff]
        %v245 = vld [vmem:[%s240 + $0x20] sm:$0xff]
        %v246 = vld [vmem:[%s240 + $0x28] sm:$0xff]
        %v247 = vld [vmem:[%s240 + $0x30] sm:$0xff]
        %v248 = vld [vmem:[%s240 + $0x38] sm:$0xff]
        %v249 = vld [vmem:[%s240 + $0x40] sm:$0xff]
        %v250 = vld [vmem:[%s240 + $0x48] sm:$0xff]
        %v251 = vld [vmem:[%s240 + $0x50] sm:$0xff]
        %v252 = vld [vmem:[%s240 + $0x58] sm:$0xff]
        %v253 = vld [vmem:[%s240 + $0x60] sm:$0xff]
        %v254 = vld [vmem:[%s240 + $0x68] sm:$0xff]
        %v255 = vld [vmem:[%s240 + $0x70] sm:$0xff]
        %v256 = vld [vmem:[%s240 + $0x78] sm:$0xff]
        %s257 = ssub.s32 %s234, 128
        %v258 = vstv %s257
        %v259 = vsub.s32 %v241, %v258
        %v260 = vsub.s32 %v242, %v258
        %v261 = vsub.s32 %v243, %v258
        %v262 = vsub.s32 %v244, %v258
        %v263 = vsub.s32 %v245, %v258
        %v264 = vsub.s32 %v246, %v258
        %v265 = vsub.s32 %v247, %v258
        %v266 = vsub.s32 %v248, %v258
        %v267 = vsub.s32 %v249, %v258
        %v268 = vsub.s32 %v250, %v258
        %v269 = vsub.s32 %v251, %v258
        %v270 = vsub.s32 %v252, %v258
        %v271 = vsub.s32 %v253, %v258
        %v272 = vsub.s32 %v254, %v258
        %v273 = vsub.s32 %v255, %v258
        %v274 = vsub.s32 %v256, %v258
        %275 = vset.pattern.permute.xlu0 0
        %276 = vperm.xlu0 %275, %v259
        %v277 = vpop.permute.xlu0 %276
        %278 = vset.pattern.permute.xlu0 0
        %279 = vperm.xlu0 %278, %v260
        %v280 = vpop.permute.xlu0 %279
        %281 = vset.pattern.permute.xlu0 0
        %282 = vperm.xlu0 %281, %v261
        %v283 = vpop.permute.xlu0 %282
        %284 = vset.pattern.permute.xlu0 0
        %285 = vperm.xlu0 %284, %v262
        %v286 = vpop.permute.xlu0 %285
        %287 = vset.pattern.permute.xlu0 0
        %288 = vperm.xlu0 %287, %v263
        %v289 = vpop.permute.xlu0 %288
        %290 = vset.pattern.permute.xlu0 0
        %291 = vperm.xlu0 %290, %v264
        %v292 = vpop.permute.xlu0 %291
        %293 = vset.pattern.permute.xlu0 0
        %294 = vperm.xlu0 %293, %v265
        %v295 = vpop.permute.xlu0 %294
        %296 = vset.pattern.permute.xlu0 0
        %297 = vperm.xlu0 %296, %v266
        %v298 = vpop.permute.xlu0 %297
        %299 = vset.pattern.permute.xlu0 0
        %300 = vperm.xlu0 %299, %v267
        %v301 = vpop.permute.xlu0 %300
        %302 = vset.pattern.permute.xlu0 0
        %303 = vperm.xlu0 %302, %v268
        %v304 = vpop.permute.xlu0 %303
        %305 = vset.pattern.permute.xlu0 0
        %306 = vperm.xlu0 %305, %v269
        %v307 = vpop.permute.xlu0 %306
        %308 = vset.pattern.permute.xlu0 0
        %309 = vperm.xlu0 %308, %v270
        %v310 = vpop.permute.xlu0 %309
        %311 = vset.pattern.permute.xlu0 0
        %312 = vperm.xlu0 %311, %v271
        %v313 = vpop.permute.xlu0 %312
        %314 = vset.pattern.permute.xlu0 0
        %315 = vperm.xlu0 %314, %v272
        %v316 = vpop.permute.xlu0 %315
        %317 = vset.pattern.permute.xlu0 0
        %318 = vperm.xlu0 %317, %v273
        %v319 = vpop.permute.xlu0 %318
        %320 = vset.pattern.permute.xlu0 0
        %321 = vperm.xlu0 %320, %v274
        %v322 = vpop.permute.xlu0 %321
        %vm323 = vcmp.eq.s32.totalorder %v277, %v237
        %vm324 = vcmp.eq.s32.totalorder %v277, %v238
        %vm325 = vcmp.eq.s32.totalorder %v280, %v237
        %vm326 = vcmp.eq.s32.totalorder %v280, %v238
        %vm327 = vcmp.eq.s32.totalorder %v283, %v237
        %vm328 = vcmp.eq.s32.totalorder %v283, %v238
        %vm329 = vcmp.eq.s32.totalorder %v286, %v237
        %vm330 = vcmp.eq.s32.totalorder %v286, %v238
        %vm331 = vcmp.eq.s32.totalorder %v289, %v237
        %vm332 = vcmp.eq.s32.totalorder %v289, %v238
        %vm333 = vcmp.eq.s32.totalorder %v292, %v237
        %vm334 = vcmp.eq.s32.totalorder %v292, %v238
        %vm335 = vcmp.eq.s32.totalorder %v295, %v237
        %vm336 = vcmp.eq.s32.totalorder %v295, %v238
        %vm337 = vcmp.eq.s32.totalorder %v298, %v237
        %vm338 = vcmp.eq.s32.totalorder %v298, %v238
        %vm339 = vcmp.eq.s32.totalorder %v301, %v237
        %vm340 = vcmp.eq.s32.totalorder %v301, %v238
        %vm341 = vcmp.eq.s32.totalorder %v304, %v237
        %vm342 = vcmp.eq.s32.totalorder %v304, %v238
        %vm343 = vcmp.eq.s32.totalorder %v307, %v237
        %vm344 = vcmp.eq.s32.totalorder %v307, %v238
        %vm345 = vcmp.eq.s32.totalorder %v310, %v237
        %vm346 = vcmp.eq.s32.totalorder %v310, %v238
        %vm347 = vcmp.eq.s32.totalorder %v313, %v237
        %vm348 = vcmp.eq.s32.totalorder %v313, %v238
        %vm349 = vcmp.eq.s32.totalorder %v316, %v237
        %vm350 = vcmp.eq.s32.totalorder %v316, %v238
        %vm351 = vcmp.eq.s32.totalorder %v319, %v237
        %vm352 = vcmp.eq.s32.totalorder %v319, %v238
        %vm353 = vcmp.eq.s32.totalorder %v322, %v237
        %vm354 = vcmp.eq.s32.totalorder %v322, %v238
        %v355 = vsel %vm323, 1, 0
        %v356 = vsel %vm324, 1, 0
        %v357 = vsel %vm325, 1, 0
        %v358 = vsel %vm326, 1, 0
        %v359 = vsel %vm327, 1, 0
        %v360 = vsel %vm328, 1, 0
        %v361 = vsel %vm329, 1, 0
        %v362 = vsel %vm330, 1, 0
        %v363 = vsel %vm331, 1, 0
        %v364 = vsel %vm332, 1, 0
        %v365 = vsel %vm333, 1, 0
        %v366 = vsel %vm334, 1, 0
        %v367 = vsel %vm335, 1, 0
        %v368 = vsel %vm336, 1, 0
        %v369 = vsel %vm337, 1, 0
        %v370 = vsel %vm338, 1, 0
        %v371 = vsel %vm339, 1, 0
        %v372 = vsel %vm340, 1, 0
        %v373 = vsel %vm341, 1, 0
        %v374 = vsel %vm342, 1, 0
        %v375 = vsel %vm343, 1, 0
        %v376 = vsel %vm344, 1, 0
        %v377 = vsel %vm345, 1, 0
        %v378 = vsel %vm346, 1, 0
        %v379 = vsel %vm347, 1, 0
        %v380 = vsel %vm348, 1, 0
        %v381 = vsel %vm349, 1, 0
        %v382 = vsel %vm350, 1, 0
        %v383 = vsel %vm351, 1, 0
        %v384 = vsel %vm352, 1, 0
        %v385 = vsel %vm353, 1, 0
        %v386 = vsel %vm354, 1, 0
        %v387 = vcvt.s32.f32 %v355
        %v388 = vcvt.s32.f32 %v356
        %v389 = vcvt.s32.f32 %v357
        %v390 = vcvt.s32.f32 %v358
        %v391 = vcvt.s32.f32 %v359
        %v392 = vcvt.s32.f32 %v360
        %v393 = vcvt.s32.f32 %v361
        %v394 = vcvt.s32.f32 %v362
        %v395 = vcvt.s32.f32 %v363
        %v396 = vcvt.s32.f32 %v364
        %v397 = vcvt.s32.f32 %v365
        %v398 = vcvt.s32.f32 %v366
        %v399 = vcvt.s32.f32 %v367
        %v400 = vcvt.s32.f32 %v368
        %v401 = vcvt.s32.f32 %v369
        %v402 = vcvt.s32.f32 %v370
        %v403 = vcvt.s32.f32 %v371
        %v404 = vcvt.s32.f32 %v372
        %v405 = vcvt.s32.f32 %v373
        %v406 = vcvt.s32.f32 %v374
        %v407 = vcvt.s32.f32 %v375
        %v408 = vcvt.s32.f32 %v376
        %v409 = vcvt.s32.f32 %v377
        %v410 = vcvt.s32.f32 %v378
        %v411 = vcvt.s32.f32 %v379
        %v412 = vcvt.s32.f32 %v380
        %v413 = vcvt.s32.f32 %v381
        %v414 = vcvt.s32.f32 %v382
        %v415 = vcvt.s32.f32 %v383
        %v416 = vcvt.s32.f32 %v384
        %v417 = vcvt.s32.f32 %v385
        %v418 = vcvt.s32.f32 %v386
        %s419 = smul.u32 %s235, 64
        %s420 = scalar_lea.vmem %s212, %s419
        %v421 = vld [vmem:[%s420] sm:$0xff]
        %v422 = vld [vmem:[%s420 + $0x8] sm:$0xff]
        %v423 = vld [vmem:[%s420 + $0x10] sm:$0xff]
        %v424 = vld [vmem:[%s420 + $0x18] sm:$0xff]
        %v425 = vld [vmem:[%s420 + $0x20] sm:$0xff]
        %v426 = vld [vmem:[%s420 + $0x28] sm:$0xff]
        %v427 = vld [vmem:[%s420 + $0x30] sm:$0xff]
        %v428 = vld [vmem:[%s420 + $0x38] sm:$0xff]
        %429 = vmatprep.subr.mxu0 %v388
        %430 = vmatpush1.msra.mxu0 %v387
        %431 = vmatprep.subr.mxu0 %v390
        %432 = vmatpush1.msra.mxu0 %v389
        %433 = vmatprep.subr.mxu0 %v392
        %434 = vmatpush1.msra.mxu0 %v391
        %435 = vmatprep.subr.mxu0 %v394
        %436 = vmatpush1.msra.mxu0 %v393
        %437 = vmatprep.subr.mxu0 %v396
        %438 = vmatpush1.msra.mxu0 %v395
        %439 = vmatprep.subr.mxu0 %v398
        %440 = vmatpush1.msra.mxu0 %v397
        %441 = vmatprep.subr.mxu0 %v400
        %442 = vmatpush1.msra.mxu0 %v399
        %443 = vmatprep.subr.mxu0 %v402
        %444 = vmatpush1.msra.mxu0 %v401
        %445 = vmatprep.subr.mxu0 %v404
        %446 = vmatpush1.msra.mxu0 %v403
        %447 = vmatprep.subr.mxu0 %v406
        %448 = vmatpush1.msra.mxu0 %v405
        %449 = vmatprep.subr.mxu0 %v408
        %450 = vmatpush1.msra.mxu0 %v407
        %451 = vmatprep.subr.mxu0 %v410
        %452 = vmatpush1.msra.mxu0 %v409
        %453 = vmatprep.subr.mxu0 %v412
        %454 = vmatpush1.msra.mxu0 %v411
        %455 = vmatprep.subr.mxu0 %v414
        %456 = vmatpush1.msra.mxu0 %v413
        %457 = vmatprep.subr.mxu0 %v416
        %458 = vmatpush1.msra.mxu0 %v415
        %459 = vmatprep.subr.mxu0 %v418
        %460 = vmatpush1.msra.mxu0 %v417
        %461 = vmatprep.subr.mxu0 0.0
        %462 = vmatpush1.msra.mxu0 0.0
        %463 = vmatprep.subr.mxu0 0.0
        %464 = vmatpush1.msra.mxu0 0.0
        %465 = vmatprep.subr.mxu0 0.0
        %466 = vmatpush1.msra.mxu0 0.0
        %467 = vmatprep.subr.mxu0 0.0
        %468 = vmatpush1.msra.mxu0 0.0
        %469 = vmatprep.subr.mxu0 0.0
        %470 = vmatpush1.msra.mxu0 0.0
        %471 = vmatprep.subr.mxu0 0.0
        %472 = vmatpush1.msra.mxu0 0.0
        %473 = vmatprep.subr.mxu0 0.0
        %474 = vmatpush1.msra.mxu0 0.0
        %475 = vmatprep.subr.mxu0 0.0
        %476 = vmatpush1.msra.mxu0 0.0
        %477 = vmatprep.subr.mxu0 0.0
        %478 = vmatpush1.msra.mxu0 0.0
        %479 = vmatprep.subr.mxu0 0.0
        %480 = vmatpush1.msra.mxu0 0.0
        %481 = vmatprep.subr.mxu0 0.0
        %482 = vmatpush1.msra.mxu0 0.0
        %483 = vmatprep.subr.mxu0 0.0
        %484 = vmatpush1.msra.mxu0 0.0
        %485 = vmatprep.subr.mxu0 0.0
        %486 = vmatpush1.msra.mxu0 0.0
        %487 = vmatprep.subr.mxu0 0.0
        %488 = vmatpush1.msra.mxu0 0.0
        %489 = vmatprep.subr.mxu0 0.0
        %490 = vmatpush1.msra.mxu0 0.0
        %491 = vmatprep.subr.mxu0 0.0
        %492 = vmatpush1.msra.mxu0 0.0
        %493 = vmatprep.mubr.f32.mxu0 0.0
        %494 = vmatmul.mubr.f32.gmra.mrb[0].mxu0 %v421
        %v495 = vpop.f32.mrb[0].mxu0
        %v496 = vadd.f32 0.0, %v495
        %v497 = vpop.f32.mrb[0].mxu0
        %v498 = vadd.f32 0.0, %v497
        %499 = vmatprep.mubr.f32.mxu0 0.0
        %500 = vmatmul.mubr.f32.gmra.mrb[0].mxu0 %v422
        %v501 = vpop.f32.mrb[0].mxu0
        %v502 = vadd.f32 0.0, %v501
        %v503 = vpop.f32.mrb[0].mxu0
        %v504 = vadd.f32 0.0, %v503
        %505 = vmatprep.mubr.f32.mxu0 0.0
        %506 = vmatmul.mubr.f32.gmra.mrb[0].mxu0 %v423
        %v507 = vpop.f32.mrb[0].mxu0
        %v508 = vadd.f32 0.0, %v507
        %v509 = vpop.f32.mrb[0].mxu0
        %v510 = vadd.f32 0.0, %v509
        %511 = vmatprep.mubr.f32.mxu0 0.0
        %512 = vmatmul.mubr.f32.gmra.mrb[0].mxu0 %v424
        %v513 = vpop.f32.mrb[0].mxu0
        %v514 = vadd.f32 0.0, %v513
        %v515 = vpop.f32.mrb[0].mxu0
        %v516 = vadd.f32 0.0, %v515
        %517 = vmatprep.mubr.f32.mxu0 0.0
        %518 = vmatmul.mubr.f32.gmra.mrb[0].mxu0 %v425
        %v519 = vpop.f32.mrb[0].mxu0
        %v520 = vadd.f32 0.0, %v519
        %v521 = vpop.f32.mrb[0].mxu0
        %v522 = vadd.f32 0.0, %v521
        %523 = vmatprep.mubr.f32.mxu0 0.0
        %524 = vmatmul.mubr.f32.gmra.mrb[0].mxu0 %v426
        %v525 = vpop.f32.mrb[0].mxu0
        %v526 = vadd.f32 0.0, %v525
        %v527 = vpop.f32.mrb[0].mxu0
        %v528 = vadd.f32 0.0, %v527
        %529 = vmatprep.mubr.f32.mxu0 0.0
        %530 = vmatmul.mubr.f32.gmra.mrb[0].mxu0 %v427
        %v531 = vpop.f32.mrb[0].mxu0
        %v532 = vadd.f32 0.0, %v531
        %v533 = vpop.f32.mrb[0].mxu0
        %v534 = vadd.f32 0.0, %v533
        %535 = vmatprep.mubr.f32.mxu0 0.0
        %536 = vmatmul.mubr.f32.gmra.mrb[0].mxu0 %v428
        %v537 = vpop.f32.mrb[0].mxu0
        %v538 = vadd.f32 0.0, %v537
        %v539 = vpop.f32.mrb[0].mxu0
        %v540 = vadd.f32 0.0, %v539
        %541 = vdwg.mxu0
        %542 = vst [vmem:[#allocation2] sm:$0xff] %v496
        %543 = vst [vmem:[#allocation2 + $0x8] sm:$0xff] %v498
        %544 = vst [vmem:[#allocation2 + $0x10] sm:$0xff] %v502
        %545 = vst [vmem:[#allocation2 + $0x18] sm:$0xff] %v504
        %546 = vst [vmem:[#allocation2 + $0x20] sm:$0xff] %v508
        %547 = vst [vmem:[#allocation2 + $0x28] sm:$0xff] %v510
        %548 = vst [vmem:[#allocation2 + $0x30] sm:$0xff] %v514
        %549 = vst [vmem:[#allocation2 + $0x38] sm:$0xff] %v516
        %550 = vst [vmem:[#allocation2 + $0x40] sm:$0xff] %v520
        %551 = vst [vmem:[#allocation2 + $0x48] sm:$0xff] %v522
        %552 = vst [vmem:[#allocation2 + $0x50] sm:$0xff] %v526
        %553 = vst [vmem:[#allocation2 + $0x58] sm:$0xff] %v528
        %554 = vst [vmem:[#allocation2 + $0x60] sm:$0xff] %v532
        %555 = vst [vmem:[#allocation2 + $0x68] sm:$0xff] %v534
        %556 = vst [vmem:[#allocation2 + $0x70] sm:$0xff] %v538
        %557 = vst [vmem:[#allocation2 + $0x78] sm:$0xff] %v540
        %p558 = scmp.gt.s32.totalorder %s224, 1
        // Predicated region
        $region37: #{trf_aligner.1} parent=35 // pred_check
          %p559 = pneg %p558
        $region38: #{trf_aligner.1} parent=35 // pred_check_branch
          %561 = sbr.rel (%p559) target = $region40
        $region39: #{trf_aligner.1} parent=35 // pred_region
          // While loop
          $region41: #{trf_aligner.1} parent=39 // loop_pre_header
            _
          $region42: #{trf_aligner.1} parent=39 // loop_header
            %s563 = sphi 1, %s565
            %p564 = scmp.ge.s32.totalorder %s563, %s224
          $region43: #{trf_aligner.1} parent=39 // loop_header_branch
            %567 = sbr.rel (%p564) target = $region47
          $region44: #{trf_aligner.1} parent=39 // loop_body
            %v568 = vld [vmem:[#allocation2] sm:$0xff]
            %v569 = vld [vmem:[#allocation2 + $0x8] sm:$0xff]
            %v570 = vld [vmem:[#allocation2 + $0x10] sm:$0xff]
            %v571 = vld [vmem:[#allocation2 + $0x18] sm:$0xff]
            %v572 = vld [vmem:[#allocation2 + $0x20] sm:$0xff]
            %v573 = vld [vmem:[#allocation2 + $0x28] sm:$0xff]
            %v574 = vld [vmem:[#allocation2 + $0x30] sm:$0xff]
            %v575 = vld [vmem:[#allocation2 + $0x38] sm:$0xff]
            %v576 = vld [vmem:[#allocation2 + $0x40] sm:$0xff]
            %v577 = vld [vmem:[#allocation2 + $0x48] sm:$0xff]
            %v578 = vld [vmem:[#allocation2 + $0x50] sm:$0xff]
            %v579 = vld [vmem:[#allocation2 + $0x58] sm:$0xff]
            %v580 = vld [vmem:[#allocation2 + $0x60] sm:$0xff]
            %v581 = vld [vmem:[#allocation2 + $0x68] sm:$0xff]
            %v582 = vld [vmem:[#allocation2 + $0x70] sm:$0xff]
            %v583 = vld [vmem:[#allocation2 + $0x78] sm:$0xff]
            %s584 = sadd.s32 %s235, %s563
            %s585 = smul.u32 %s584, 128
            %s586 = scalar_lea.vmem %s203, %s585
            %v587 = vld [vmem:[%s586] sm:$0xff]
            %v588 = vld [vmem:[%s586 + $0x8] sm:$0xff]
            %v589 = vld [vmem:[%s586 + $0x10] sm:$0xff]
            %v590 = vld [vmem:[%s586 + $0x18] sm:$0xff]
            %v591 = vld [vmem:[%s586 + $0x20] sm:$0xff]
            %v592 = vld [vmem:[%s586 + $0x28] sm:$0xff]
            %v593 = vld [vmem:[%s586 + $0x30] sm:$0xff]
            %v594 = vld [vmem:[%s586 + $0x38] sm:$0xff]
            %v595 = vld [vmem:[%s586 + $0x40] sm:$0xff]
            %v596 = vld [vmem:[%s586 + $0x48] sm:$0xff]
            %v597 = vld [vmem:[%s586 + $0x50] sm:$0xff]
            %v598 = vld [vmem:[%s586 + $0x58] sm:$0xff]
            %v599 = vld [vmem:[%s586 + $0x60] sm:$0xff]
            %v600 = vld [vmem:[%s586 + $0x68] sm:$0xff]
            %v601 = vld [vmem:[%s586 + $0x70] sm:$0xff]
            %v602 = vld [vmem:[%s586 + $0x78] sm:$0xff]
            %v603 = vsub.s32 %v587, %v258
            %v604 = vsub.s32 %v588, %v258
            %v605 = vsub.s32 %v589, %v258
            %v606 = vsub.s32 %v590, %v258
            %v607 = vsub.s32 %v591, %v258
            %v608 = vsub.s32 %v592, %v258
            %v609 = vsub.s32 %v593, %v258
            %v610 = vsub.s32 %v594, %v258
            %v611 = vsub.s32 %v595, %v258
            %v612 = vsub.s32 %v596, %v258
            %v613 = vsub.s32 %v597, %v258
            %v614 = vsub.s32 %v598, %v258
            %v615 = vsub.s32 %v599, %v258
            %v616 = vsub.s32 %v600, %v258
            %v617 = vsub.s32 %v601, %v258
            %v618 = vsub.s32 %v602, %v258
            %619 = vset.pattern.permute.xlu0 0
            %620 = vperm.xlu0 %619, %v603
            %v621 = vpop.permute.xlu0 %620
            %622 = vset.pattern.permute.xlu0 0
            %623 = vperm.xlu0 %622, %v604
            %v624 = vpop.permute.xlu0 %623
            %625 = vset.pattern.permute.xlu0 0
            %626 = vperm.xlu0 %625, %v605
            %v627 = vpop.permute.xlu0 %626
            %628 = vset.pattern.permute.xlu0 0
            %629 = vperm.xlu0 %628, %v606
            %v630 = vpop.permute.xlu0 %629
            %631 = vset.pattern.permute.xlu0 0
            %632 = vperm.xlu0 %631, %v607
            %v633 = vpop.permute.xlu0 %632
            %634 = vset.pattern.permute.xlu0 0
            %635 = vperm.xlu0 %634, %v608
            %v636 = vpop.permute.xlu0 %635
            %637 = vset.pattern.permute.xlu0 0
            %638 = vperm.xlu0 %637, %v609
            %v639 = vpop.permute.xlu0 %638
            %640 = vset.pattern.permute.xlu0 0
            %641 = vperm.xlu0 %640, %v610
            %v642 = vpop.permute.xlu0 %641
            %643 = vset.pattern.permute.xlu0 0
            %644 = vperm.xlu0 %643, %v611
            %v645 = vpop.permute.xlu0 %644
            %646 = vset.pattern.permute.xlu0 0
            %647 = vperm.xlu0 %646, %v612
            %v648 = vpop.permute.xlu0 %647
            %649 = vset.pattern.permute.xlu0 0
            %650 = vperm.xlu0 %649, %v613
            %v651 = vpop.permute.xlu0 %650
            %652 = vset.pattern.permute.xlu0 0
            %653 = vperm.xlu0 %652, %v614
            %v654 = vpop.permute.xlu0 %653
            %655 = vset.pattern.permute.xlu0 0
            %656 = vperm.xlu0 %655, %v615
            %v657 = vpop.permute.xlu0 %656
            %658 = vset.pattern.permute.xlu0 0
            %659 = vperm.xlu0 %658, %v616
            %v660 = vpop.permute.xlu0 %659
            %661 = vset.pattern.permute.xlu0 0
            %662 = vperm.xlu0 %661, %v617
            %v663 = vpop.permute.xlu0 %662
            %664 = vset.pattern.permute.xlu0 0
            %665 = vperm.xlu0 %664, %v618
            %v666 = vpop.permute.xlu0 %665
            %vm667 = vcmp.eq.s32.totalorder %v621, %v237
            %vm668 = vcmp.eq.s32.totalorder %v621, %v238
            %vm669 = vcmp.eq.s32.totalorder %v624, %v237
            %vm670 = vcmp.eq.s32.totalorder %v624, %v238
            %vm671 = vcmp.eq.s32.totalorder %v627, %v237
            %vm672 = vcmp.eq.s32.totalorder %v627, %v238
            %vm673 = vcmp.eq.s32.totalorder %v630, %v237
            %vm674 = vcmp.eq.s32.totalorder %v630, %v238
            %vm675 = vcmp.eq.s32.totalorder %v633, %v237
            %vm676 = vcmp.eq.s32.totalorder %v633, %v238
            %vm677 = vcmp.eq.s32.totalorder %v636, %v237
            %vm678 = vcmp.eq.s32.totalorder %v636, %v238
            %vm679 = vcmp.eq.s32.totalorder %v639, %v237
            %vm680 = vcmp.eq.s32.totalorder %v639, %v238
            %vm681 = vcmp.eq.s32.totalorder %v642, %v237
            %vm682 = vcmp.eq.s32.totalorder %v642, %v238
            %vm683 = vcmp.eq.s32.totalorder %v645, %v237
            %vm684 = vcmp.eq.s32.totalorder %v645, %v238
            %vm685 = vcmp.eq.s32.totalorder %v648, %v237
            %vm686 = vcmp.eq.s32.totalorder %v648, %v238
            %vm687 = vcmp.eq.s32.totalorder %v651, %v237
            %vm688 = vcmp.eq.s32.totalorder %v651, %v238
            %vm689 = vcmp.eq.s32.totalorder %v654, %v237
            %vm690 = vcmp.eq.s32.totalorder %v654, %v238
            %vm691 = vcmp.eq.s32.totalorder %v657, %v237
            %vm692 = vcmp.eq.s32.totalorder %v657, %v238
            %vm693 = vcmp.eq.s32.totalorder %v660, %v237
            %vm694 = vcmp.eq.s32.totalorder %v660, %v238
            %vm695 = vcmp.eq.s32.totalorder %v663, %v237
            %vm696 = vcmp.eq.s32.totalorder %v663, %v238
            %vm697 = vcmp.eq.s32.totalorder %v666, %v237
            %vm698 = vcmp.eq.s32.totalorder %v666, %v238
            %v699 = vsel %vm667, 1, 0
            %v700 = vsel %vm668, 1, 0
            %v701 = vsel %vm669, 1, 0
            %v702 = vsel %vm670, 1, 0
            %v703 = vsel %vm671, 1, 0
            %v704 = vsel %vm672, 1, 0
            %v705 = vsel %vm673, 1, 0
            %v706 = vsel %vm674, 1, 0
            %v707 = vsel %vm675, 1, 0
            %v708 = vsel %vm676, 1, 0
            %v709 = vsel %vm677, 1, 0
            %v710 = vsel %vm678, 1, 0
            %v711 = vsel %vm679, 1, 0
            %v712 = vsel %vm680, 1, 0
            %v713 = vsel %vm681, 1, 0
            %v714 = vsel %vm682, 1, 0
            %v715 = vsel %vm683, 1, 0
            %v716 = vsel %vm684, 1, 0
            %v717 = vsel %vm685, 1, 0
            %v718 = vsel %vm686, 1, 0
            %v719 = vsel %vm687, 1, 0
            %v720 = vsel %vm688, 1, 0
            %v721 = vsel %vm689, 1, 0
            %v722 = vsel %vm690, 1, 0
            %v723 = vsel %vm691, 1, 0
            %v724 = vsel %vm692, 1, 0
            %v725 = vsel %vm693, 1, 0
            %v726 = vsel %vm694, 1, 0
            %v727 = vsel %vm695, 1, 0
            %v728 = vsel %vm696, 1, 0
            %v729 = vsel %vm697, 1, 0
            %v730 = vsel %vm698, 1, 0
            %v731 = vcvt.s32.f32 %v699
            %v732 = vcvt.s32.f32 %v700
            %v733 = vcvt.s32.f32 %v701
            %v734 = vcvt.s32.f32 %v702
            %v735 = vcvt.s32.f32 %v703
            %v736 = vcvt.s32.f32 %v704
            %v737 = vcvt.s32.f32 %v705
            %v738 = vcvt.s32.f32 %v706
            %v739 = vcvt.s32.f32 %v707
            %v740 = vcvt.s32.f32 %v708
            %v741 = vcvt.s32.f32 %v709
            %v742 = vcvt.s32.f32 %v710
            %v743 = vcvt.s32.f32 %v711
            %v744 = vcvt.s32.f32 %v712
            %v745 = vcvt.s32.f32 %v713
            %v746 = vcvt.s32.f32 %v714
            %v747 = vcvt.s32.f32 %v715
            %v748 = vcvt.s32.f32 %v716
            %v749 = vcvt.s32.f32 %v717
            %v750 = vcvt.s32.f32 %v718
            %v751 = vcvt.s32.f32 %v719
            %v752 = vcvt.s32.f32 %v720
            %v753 = vcvt.s32.f32 %v721
            %v754 = vcvt.s32.f32 %v722
            %v755 = vcvt.s32.f32 %v723
            %v756 = vcvt.s32.f32 %v724
            %v757 = vcvt.s32.f32 %v725
            %v758 = vcvt.s32.f32 %v726
            %v759 = vcvt.s32.f32 %v727
            %v760 = vcvt.s32.f32 %v728
            %v761 = vcvt.s32.f32 %v729
            %v762 = vcvt.s32.f32 %v730
            %s763 = smul.u32 %s584, 64
            %s764 = scalar_lea.vmem %s212, %s763
            %v765 = vld [vmem:[%s764] sm:$0xff]
            %v766 = vld [vmem:[%s764 + $0x8] sm:$0xff]
            %v767 = vld [vmem:[%s764 + $0x10] sm:$0xff]
            %v768 = vld [vmem:[%s764 + $0x18] sm:$0xff]
            %v769 = vld [vmem:[%s764 + $0x20] sm:$0xff]
            %v770 = vld [vmem:[%s764 + $0x28] sm:$0xff]
            %v771 = vld [vmem:[%s764 + $0x30] sm:$0xff]
            %v772 = vld [vmem:[%s764 + $0x38] sm:$0xff]
            %773 = vmatprep.subr.mxu0 %v732
            %774 = vmatpush1.msra.mxu0 %v731
            %775 = vmatprep.subr.mxu0 %v734
            %776 = vmatpush1.msra.mxu0 %v733
            %777 = vmatprep.subr.mxu0 %v736
            %778 = vmatpush1.msra.mxu0 %v735
            %779 = vmatprep.subr.mxu0 %v738
            %780 = vmatpush1.msra.mxu0 %v737
            %781 = vmatprep.subr.mxu0 %v740
            %782 = vmatpush1.msra.mxu0 %v739
            %783 = vmatprep.subr.mxu0 %v742
            %784 = vmatpush1.msra.mxu0 %v741
            %785 = vmatprep.subr.mxu0 %v744
            %786 = vmatpush1.msra.mxu0 %v743
            %787 = vmatprep.subr.mxu0 %v746
            %788 = vmatpush1.msra.mxu0 %v745
            %789 = vmatprep.subr.mxu0 %v748
            %790 = vmatpush1.msra.mxu0 %v747
            %791 = vmatprep.subr.mxu0 %v750
            %792 = vmatpush1.msra.mxu0 %v749
            %793 = vmatprep.subr.mxu0 %v752
            %794 = vmatpush1.msra.mxu0 %v751
            %795 = vmatprep.subr.mxu0 %v754
            %796 = vmatpush1.msra.mxu0 %v753
            %797 = vmatprep.subr.mxu0 %v756
            %798 = vmatpush1.msra.mxu0 %v755
            %799 = vmatprep.subr.mxu0 %v758
            %800 = vmatpush1.msra.mxu0 %v757
            %801 = vmatprep.subr.mxu0 %v760
            %802 = vmatpush1.msra.mxu0 %v759
            %803 = vmatprep.subr.mxu0 %v762
            %804 = vmatpush1.msra.mxu0 %v761
            %805 = vmatprep.subr.mxu0 0.0
            %806 = vmatpush1.msra.mxu0 0.0
            %807 = vmatprep.subr.mxu0 0.0
            %808 = vmatpush1.msra.mxu0 0.0
            %809 = vmatprep.subr.mxu0 0.0
            %810 = vmatpush1.msra.mxu0 0.0
            %811 = vmatprep.subr.mxu0 0.0
            %812 = vmatpush1.msra.mxu0 0.0
            %813 = vmatprep.subr.mxu0 0.0
            %814 = vmatpush1.msra.mxu0 0.0
            %815 = vmatprep.subr.mxu0 0.0
            %816 = vmatpush1.msra.mxu0 0.0
            %817 = vmatprep.subr.mxu0 0.0
            %818 = vmatpush1.msra.mxu0 0.0
            %819 = vmatprep.subr.mxu0 0.0
            %820 = vmatpush1.msra.mxu0 0.0
            %821 = vmatprep.subr.mxu0 0.0
            %822 = vmatpush1.msra.mxu0 0.0
            %823 = vmatprep.subr.mxu0 0.0
            %824 = vmatpush1.msra.mxu0 0.0
            %825 = vmatprep.subr.mxu0 0.0
            %826 = vmatpush1.msra.mxu0 0.0
            %827 = vmatprep.subr.mxu0 0.0
            %828 = vmatpush1.msra.mxu0 0.0
            %829 = vmatprep.subr.mxu0 0.0
            %830 = vmatpush1.msra.mxu0 0.0
            %831 = vmatprep.subr.mxu0 0.0
            %832 = vmatpush1.msra.mxu0 0.0
            %833 = vmatprep.subr.mxu0 0.0
            %834 = vmatpush1.msra.mxu0 0.0
            %835 = vmatprep.subr.mxu0 0.0
            %836 = vmatpush1.msra.mxu0 0.0
            %837 = vmatprep.mubr.f32.mxu0 0.0
            %838 = vmatmul.mubr.f32.gmra.mrb[0].mxu0 %v765
            %v839 = vpop.f32.mrb[0].mxu0
            %v840 = vadd.f32 0.0, %v839
            %v841 = vpop.f32.mrb[0].mxu0
            %v842 = vadd.f32 0.0, %v841
            %843 = vmatprep.mubr.f32.mxu0 0.0
            %844 = vmatmul.mubr.f32.gmra.mrb[0].mxu0 %v766
            %v845 = vpop.f32.mrb[0].mxu0
            %v846 = vadd.f32 0.0, %v845
            %v847 = vpop.f32.mrb[0].mxu0
            %v848 = vadd.f32 0.0, %v847
            %849 = vmatprep.mubr.f32.mxu0 0.0
            %850 = vmatmul.mubr.f32.gmra.mrb[0].mxu0 %v767
            %v851 = vpop.f32.mrb[0].mxu0
            %v852 = vadd.f32 0.0, %v851
            %v853 = vpop.f32.mrb[0].mxu0
            %v854 = vadd.f32 0.0, %v853
            %855 = vmatprep.mubr.f32.mxu0 0.0
            %856 = vmatmul.mubr.f32.gmra.mrb[0].mxu0 %v768
            %v857 = vpop.f32.mrb[0].mxu0
            %v858 = vadd.f32 0.0, %v857
            %v859 = vpop.f32.mrb[0].mxu0
            %v860 = vadd.f32 0.0, %v859
            %861 = vmatprep.mubr.f32.mxu0 0.0
            %862 = vmatmul.mubr.f32.gmra.mrb[0].mxu0 %v769
            %v863 = vpop.f32.mrb[0].mxu0
            %v864 = vadd.f32 0.0, %v863
            %v865 = vpop.f32.mrb[0].mxu0
            %v866 = vadd.f32 0.0, %v865
            %867 = vmatprep.mubr.f32.mxu0 0.0
            %868 = vmatmul.mubr.f32.gmra.mrb[0].mxu0 %v770
            %v869 = vpop.f32.mrb[0].mxu0
            %v870 = vadd.f32 0.0, %v869
            %v871 = vpop.f32.mrb[0].mxu0
            %v872 = vadd.f32 0.0, %v871
            %873 = vmatprep.mubr.f32.mxu0 0.0
            %874 = vmatmul.mubr.f32.gmra.mrb[0].mxu0 %v771
            %v875 = vpop.f32.mrb[0].mxu0
            %v876 = vadd.f32 0.0, %v875
            %v877 = vpop.f32.mrb[0].mxu0
            %v878 = vadd.f32 0.0, %v877
            %879 = vmatprep.mubr.f32.mxu0 0.0
            %880 = vmatmul.mubr.f32.gmra.mrb[0].mxu0 %v772
            %v881 = vpop.f32.mrb[0].mxu0
            %v882 = vadd.f32 0.0, %v881
            %v883 = vpop.f32.mrb[0].mxu0
            %v884 = vadd.f32 0.0, %v883
            %885 = vdwg.mxu0
            %v886 = vadd.f32 %v568, %v840
            %v887 = vadd.f32 %v569, %v842
            %v888 = vadd.f32 %v570, %v846
            %v889 = vadd.f32 %v571, %v848
            %v890 = vadd.f32 %v572, %v852
            %v891 = vadd.f32 %v573, %v854
            %v892 = vadd.f32 %v574, %v858
            %v893 = vadd.f32 %v575, %v860
            %v894 = vadd.f32 %v576, %v864
            %v895 = vadd.f32 %v577, %v866
            %v896 = vadd.f32 %v578, %v870
            %v897 = vadd.f32 %v579, %v872
            %v898 = vadd.f32 %v580, %v876
            %v899 = vadd.f32 %v581, %v878
            %v900 = vadd.f32 %v582, %v882
            %v901 = vadd.f32 %v583, %v884
            %902 = vst [vmem:[#allocation2] sm:$0xff] %v886
            %903 = vst [vmem:[#allocation2 + $0x8] sm:$0xff] %v887
            %904 = vst [vmem:[#allocation2 + $0x10] sm:$0xff] %v888
            %905 = vst [vmem:[#allocation2 + $0x18] sm:$0xff] %v889
            %906 = vst [vmem:[#allocation2 + $0x20] sm:$0xff] %v890
            %907 = vst [vmem:[#allocation2 + $0x28] sm:$0xff] %v891
            %908 = vst [vmem:[#allocation2 + $0x30] sm:$0xff] %v892
            %909 = vst [vmem:[#allocation2 + $0x38] sm:$0xff] %v893
            %910 = vst [vmem:[#allocation2 + $0x40] sm:$0xff] %v894
            %911 = vst [vmem:[#allocation2 + $0x48] sm:$0xff] %v895
            %912 = vst [vmem:[#allocation2 + $0x50] sm:$0xff] %v896
            %913 = vst [vmem:[#allocation2 + $0x58] sm:$0xff] %v897
            %914 = vst [vmem:[#allocation2 + $0x60] sm:$0xff] %v898
            %915 = vst [vmem:[#allocation2 + $0x68] sm:$0xff] %v899
            %916 = vst [vmem:[#allocation2 + $0x70] sm:$0xff] %v900
            %917 = vst [vmem:[#allocation2 + $0x78] sm:$0xff] %v901
          $region45: #{trf_aligner.1} parent=39 // loop_footer
            %s565 = sadd.s32 %s563, 1
          $region46: #{trf_aligner.1} parent=39 // loop_footer_branch
            %562 = sbr.rel target = $region42
          $region47: #{trf_aligner.1} parent=39 // loop_exit
            _
        $region40: #{trf_aligner.1} parent=35 // pred_fallthru
          _
        %v918 = vld [vmem:[#allocation2 + $0x8] sm:$0xff]
        %v919 = vld [vmem:[#allocation2 + $0x10] sm:$0xff]
        %v920 = vld [vmem:[#allocation2 + $0x18] sm:$0xff]
        %923 = vrot.lane.b32.xlu0 %v919, 1
        %v924 = vpop.permute.xlu0 %923
        %925 = vrot.lane.b32.xlu0 %v920, 1
        %v926 = vpop.permute.xlu0 %925
        %vm927 = vcmask 7168
        %v928 = vsel %vm927, %v924, %v926
        %v930 = vadd.f32 %v918, %v928
        %v931 = vld [vmem:[#allocation2 + $0x20] sm:$0xff]
        %v932 = vld [vmem:[#allocation2 + $0x28] sm:$0xff]
        %935 = vrot.lane.b32.xlu0 %v931, 2
        %v936 = vpop.permute.xlu0 %935
        %937 = vrot.lane.b32.xlu0 %v932, 2
        %v938 = vpop.permute.xlu0 %937
        %vm939 = vcmask 15360
        %v940 = vsel %vm939, %v936, %v938
        %v942 = vadd.f32 %v930, %v940
        %v943 = vld [vmem:[#allocation2 + $0x30] sm:$0xff]
        %v944 = vld [vmem:[#allocation2 + $0x38] sm:$0xff]
        %947 = vrot.lane.b32.xlu0 %v943, 3
        %v948 = vpop.permute.xlu0 %947
        %949 = vrot.lane.b32.xlu0 %v944, 3
        %v950 = vpop.permute.xlu0 %949
        %vm951 = vcmask 23552
        %v952 = vsel %vm951, %v948, %v950
        %v954 = vadd.f32 %v942, %v952
        %v955 = vld [vmem:[#allocation2 + $0x40] sm:$0xff]
        %v956 = vld [vmem:[#allocation2 + $0x48] sm:$0xff]
        %959 = vrot.lane.b32.xlu0 %v955, 4
        %v960 = vpop.permute.xlu0 %959
        %961 = vrot.lane.b32.xlu0 %v956, 4
        %v962 = vpop.permute.xlu0 %961
        %vm963 = vcmask 31744
        %v964 = vsel %vm963, %v960, %v962
        %v966 = vadd.f32 %v954, %v964
        %v967 = vld [vmem:[#allocation2 + $0x50] sm:$0xff]
        %v968 = vld [vmem:[#allocation2 + $0x58] sm:$0xff]
        %971 = vrot.lane.b32.xlu0 %v967, 5
        %v972 = vpop.permute.xlu0 %971
        %973 = vrot.lane.b32.xlu0 %v968, 5
        %v974 = vpop.permute.xlu0 %973
        %vm975 = vcmask 39936
        %v976 = vsel %vm975, %v972, %v974
        %v978 = vadd.f32 %v966, %v976
        %v979 = vld [vmem:[#allocation2 + $0x60] sm:$0xff]
        %v980 = vld [vmem:[#allocation2 + $0x68] sm:$0xff]
        %983 = vrot.lane.b32.xlu0 %v979, 6
        %v984 = vpop.permute.xlu0 %983
        %985 = vrot.lane.b32.xlu0 %v980, 6
        %v986 = vpop.permute.xlu0 %985
        %vm987 = vcmask 48128
        %v988 = vsel %vm987, %v984, %v986
        %v990 = vadd.f32 %v978, %v988
        %v991 = vld [vmem:[#allocation2 + $0x70] sm:$0xff]
        %v992 = vld [vmem:[#allocation2 + $0x78] sm:$0xff]
        %995 = vrot.lane.b32.xlu0 %v991, 7
        %v996 = vpop.permute.xlu0 %995
        %997 = vrot.lane.b32.xlu0 %v992, 7
        %v998 = vpop.permute.xlu0 %997
        %vm999 = vcmask 56320
        %v1000 = vsel %vm999, %v996, %v998
        %v1002 = vadd.f32 %v990, %v1000
        %1003 = vst [vmem:[%s222] sm:$0xff] %v1002
      $region36: #{trf_aligner.1} parent=27 // pred_fallthru
        _
      %p1004 = scmp.lt.s32.totalorder %s31, 1
      %s1005 = scalar_select %p1004, %s31, 1
      %p1006 = scmp.lt.s32.totalorder %s30, 0
      %s1007 = scalar_select %p1006, %s30, 0
      %p1008 = scmp.lt.s32.totalorder %s32, 0
      %s1009 = scalar_select %p1008, %s32, 0
      %s1010 = sadd.s32 %s1009, %s1007
      %s1011 = sadd.s32 %s1010, %s1005
      %s1012 = smul.addr %s1011, 8
      %s1013 = scalar_lea.vmem %s4, %s1012
      // Predicated region
      $region48: #{trf_aligner.1} parent=27 // pred_check
        %p1014 = pneg %p120
      $region49: #{trf_aligner.1} parent=27 // pred_check_branch
        %1016 = sbr.rel (%p1014) target = $region51
      $region50: #{trf_aligner.1} parent=27 // pred_region
        _
      $region51: #{trf_aligner.1} parent=27 // pred_fallthru
        _
    $region28: #{trf_aligner.1} parent=5 // pred_fallthru
      _
    %p1017 = scmp.le.s32.totalorder 2, %s20
    // Predicated region
    $region52: #{trf_aligner.1} parent=5 // pred_check
      %p1018 = pneg %p1017
    $region53: #{trf_aligner.1} parent=5 // pred_check_branch
      %1020 = sbr.rel (%p1018) target = $region55
    $region54: #{trf_aligner.1} parent=5 // pred_region
      %s1021 = ssub.s32 %s20, 2
      // Predicated region
      $region56: #{trf_aligner.1} parent=54 // pred_check
        %p1022 = pneg %p126
      $region57: #{trf_aligner.1} parent=54 // pred_check_branch
        %1024 = sbr.rel (%p1022) target = $region59
      $region58: #{trf_aligner.1} parent=54 // pred_region
        %p1025 = scmp.lt.s32.totalorder %s34, 1
        %s1026 = scalar_select %p1025, %s34, 1
        %p1027 = scmp.lt.s32.totalorder %s33, 0
        %s1028 = scalar_select %p1027, %s33, 0
        %p1029 = scmp.lt.s32.totalorder %s35, 0
        %s1030 = scalar_select %p1029, %s35, 0
        %s1031 = sadd.s32 %s1030, %s1028
        %s1032 = sadd.s32 %s1031, %s1026
        %s1033 = smul.addr %s1032, 8
        %s1034 = scalar_lea.vmem %s4, %s1033
      $region59: #{trf_aligner.1} parent=54 // pred_fallthru
        _
    $region55: #{trf_aligner.1} parent=5 // pred_fallthru
      _
  $region6: #{trf_aligner.1} parent=0 // loop_footer
    %s24 = sadd.s32 1, %s20
  $region7: #{trf_aligner.1} parent=0 // loop_footer_branch
    %19 = sbr.rel target = $region3
  $region8: #{trf_aligner.1} parent=0 // loop_exit
    _

</llo_original>
